<compile_context>
chip_gen: v7x
topology: tpu7x:2x2x1
jax: 0.10.0
libtpu: 0.0.40
codegen_flags: <defaults>
</compile_context>

<pallas_src>
import functools

import jax
import jax.numpy as jnp
from jax.experimental import pallas as pl
from jax.experimental.pallas import tpu as pltpu


def _round_up(x, m):
    return ((x + m - 1) // m) * m


def fused_kernel(ids_ref, lhs_ref, w_ref, b_ref, out_ref, *, vm_pad, vg):
    """Fused gather (Gram matrix) + cosine similarity + Linear(1,1) + sigmoid.

    ids_ref : (2, tile_b) int32 VMEM block; row 0 = movie ids, row 1 = genre ids
    lhs_ref : (Vg+2, Vm8+Vg) f32, VMEM-resident block-diagonal table:
                rows 0..Vg-1, cols 0..Vm-1      = C^T  (= g_table @ m_table^T)
                row  Vg,      cols 0..Vm-1      = nm2  (movie squared norms)
                row  Vg+1,    cols Vm8..Vm8+Vg-1 = ng2 (genre squared norms)
    w_ref, b_ref : (1,) f32 scalars in SMEM (Linear(1,1) weight / bias)
    out_ref : (1, tile_b) f32 VMEM block (lane-dense output)
    """
    ids = ids_ref[...]                                   # (2, tb) int32
    m_ids = ids[0:1, :]                                  # (1, tb)
    g_ids = ids[1:2, :]                                  # (1, tb)
    tb = ids.shape[1]
    k = lhs_ref.shape[1]                                 # Vm8 + Vg

    # Combined one-hot: rows [0, Vm) select the movie id, rows [Vm8, Vm8+Vg)
    # select the genre id (offset by Vm8 so the two ranges never collide).
    rows = jax.lax.broadcasted_iota(jnp.int32, (k, tb), 0)
    onehot = ((rows == m_ids) | (rows == g_ids + vm_pad)).astype(jnp.float32)

    # One MXU push: (Vg+2, K) @ (K, tb). HIGHEST precision keeps the f32
    # table values exact through the one-hot selection.
    r = jnp.dot(lhs_ref[...], onehot,
                preferred_element_type=jnp.float32,
                precision=jax.lax.Precision.HIGHEST)     # (Vg+2, tb)

    a = r[0:vg, :]                                       # C^T @ oh_m   (Vg, tb)
    nm2_b = r[vg:vg + 1, :]                              # ||m||^2      (1, tb)
    ng2_b = r[vg + 1:vg + 2, :]                          # ||g||^2      (1, tb)
    oh_g = onehot[vm_pad:vm_pad + vg, :]                 # genre one-hot (Vg, tb)

    # dot[b] = C[m_id[b], g_id[b]] : row-select A by the genre one-hot.
    dot = jnp.sum(a * oh_g, axis=0, keepdims=True)       # (1, tb)

    # torch.cosine_similarity: dot / max(||m||*||g||, eps)
    #   == dot * rsqrt(max(||m||^2*||g||^2, eps^2));  rsqrt -> EUP.
    eps = jnp.float32(1e-8)
    cos = dot * jax.lax.rsqrt(jnp.maximum(nm2_b * ng2_b, eps * eps))

    # Linear(1,1) scalars from SMEM, then sigmoid (EUP exp).
    y = cos * w_ref[0] + b_ref[0]
    out_ref[...] = jax.nn.sigmoid(y).astype(out_ref.dtype)


def movie_genre_embedding_forward(x, m_table, g_table, fc_w, fc_b, *, tile_b=4096):
    """x: (B, 2) int -> (B, 1) float32."""
    B = x.shape[0]
    Vm, D = m_table.shape
    Vg, Dg = g_table.shape
    assert D == Dg, "movie / genre embedding dims must match"
    assert tile_b % 128 == 0, "tile_b must be a multiple of 128 (lane width)"

    # --- tile / grid selection -------------------------------------------
    # Clamp for small batches; pad B so there is no divisibility constraint.
    tile_b = min(tile_b, _round_up(B, 128))
    # Prefer >= 2 grid steps so the "parallel" axis feeds both v7x TCs.
    if _round_up(B, tile_b) // tile_b < 2 and tile_b >= 256:
        tile_b = _round_up(tile_b // 2, 128)
    B_pad = _round_up(B, tile_b)
    num_tiles = B_pad // tile_b

    # --- tiny host-side precompute (exact f32) -----------------------------
    m_tab = jnp.asarray(m_table, jnp.float32)
    g_tab = jnp.asarray(g_table, jnp.float32)
    hi = jax.lax.Precision.HIGHEST
    c_t = jnp.einsum("gd,md->gm", g_tab, m_tab, precision=hi)   # (Vg, Vm)
    nm2 = jnp.sum(m_tab * m_tab, axis=1)                        # (Vm,)
    ng2 = jnp.sum(g_tab * g_tab, axis=1)                        # (Vg,)

    vm_pad = _round_up(Vm, 8)          # sublane-align the genre one-hot slice
    K = vm_pad + Vg
    L = Vg + 2
    lhs = jnp.zeros((L, K), jnp.float32)
    lhs = lhs.at[:Vg, :Vm].set(c_t)
    lhs = lhs.at[Vg, :Vm].set(nm2)
    lhs = lhs.at[Vg + 1, vm_pad:vm_pad + Vg].set(ng2)

    # Packed ids (one DMA per step): row 0 = movie, row 1 = genre, batch on
    # lanes. Padded lanes use id 0 (computed then discarded).
    ids = jnp.zeros((2, B_pad), jnp.int32)
    ids = ids.at[0, :B].set(x[:, 0].astype(jnp.int32))
    ids = ids.at[1, :B].set(x[:, 1].astype(jnp.int32))

    w = jnp.asarray(fc_w, jnp.float32).reshape((1,))
    b = jnp.asarray(fc_b, jnp.float32).reshape((1,))

    kernel = functools.partial(fused_kernel, vm_pad=vm_pad, vg=Vg)

    out = pl.pallas_call(
        kernel,
        out_shape=jax.ShapeDtypeStruct((1, B_pad), jnp.float32),
        grid_spec=pltpu.PrefetchScalarGridSpec(
            num_scalar_prefetch=0,
            grid=(num_tiles,),
            in_specs=[
                pl.BlockSpec((2, tile_b), lambda i: (0, i)),     # packed ids
                pl.BlockSpec((L, K), lambda i: (0, 0)),          # resident table
                pl.BlockSpec(memory_space=pltpu.MemorySpace.SMEM),  # fc weight
                pl.BlockSpec(memory_space=pltpu.MemorySpace.SMEM),  # fc bias
            ],
            out_specs=pl.BlockSpec((1, tile_b), lambda i: (0, i)),
        ),
        compiler_params=pltpu.CompilerParams(
            dimension_semantics=("parallel",),
        ),
    )(ids, lhs, w, b)

    # Strip padding; present the (B, 1) shape of the PyTorch module.
    return out[0, :B].reshape(B, 1)


def reference_forward(x, m_table, g_table, fc_w, fc_b):
    memb = jnp.take(m_table, x[:, 0], axis=0)
    gemb = jnp.take(g_table, x[:, 1], axis=0)
    dot = jnp.sum(memb * gemb, axis=-1, keepdims=True)
    nm = jnp.linalg.norm(memb, axis=-1, keepdims=True)
    ng = jnp.linalg.norm(gemb, axis=-1, keepdims=True)
    cos = dot / jnp.maximum(nm * ng, 1e-8)
    y = cos * fc_w.reshape(()) + fc_b.reshape(())
    return jax.nn.sigmoid(y)


if __name__ == "__main__":
    # Module hyperparameters (small, synthetic).
    len_movies, len_genres, embedding_dim = 64, 16, 32
    batch = 200  # not a multiple of the tile -> exercises padding + 2-step grid

    key = jax.random.PRNGKey(0)
    k_m, k_g, k_w, k_b, k_xm, k_xg = jax.random.split(key, 6)

    # Parameters matching the PyTorch shapes:
    #   nn.Embedding weights ~ N(0, 1); nn.Linear(1,1) ~ U(-1, 1).
    m_table = jax.random.normal(k_m, (len_movies, embedding_dim), jnp.float32)
    g_table = jax.random.normal(k_g, (len_genres, embedding_dim), jnp.float32)
    fc_w = jax.random.uniform(k_w, (1, 1), jnp.float32, -1.0, 1.0)
    fc_b = jax.random.uniform(k_b, (1,), jnp.float32, -1.0, 1.0)

    # Input: (B, 2) integer ids -> column 0 = movie id, column 1 = genre id.
    movie_ids = jax.random.randint(k_xm, (batch, 1), 0, len_movies, jnp.int32)
    genre_ids = jax.random.randint(k_xg, (batch, 1), 0, len_genres, jnp.int32)
    x = jnp.concatenate([movie_ids, genre_ids], axis=1)  # (B, 2) int32

    out = movie_genre_embedding_forward(x, m_table, g_table, fc_w, fc_b)
    out = jax.block_until_ready(out)

    ref = reference_forward(x, m_table, g_table, fc_w, fc_b)
    assert out.shape == (batch, 1)
    assert jnp.allclose(out, ref, atol=1e-5, rtol=1e-5), "mismatch vs JAX reference"

    print("KERNEL_OK")
</pallas_src>

<mosaic_0001>
module attributes {stable_mosaic.version = 11 : i64} {
  func.func @fused_kernel(%arg0: i32, %arg1: memref<2x128xi32, #tpu.memory_space<vmem>>, %arg2: memref<18x80xf32, #tpu.memory_space<vmem>>, %arg3: memref<1xf32, #tpu.memory_space<smem>>, %arg4: memref<1xf32, #tpu.memory_space<smem>>, %arg5: memref<1x128xf32, #tpu.memory_space<vmem>>) attributes {dimension_semantics = [#tpu.dimension_semantics<parallel>], iteration_bounds = array<i64: 2>, scalar_prefetch = 0 : i64, scratch_operands = 0 : i64, tpu.core_type = #tpu.core_type<tc>, window_params = [{transform_indices = @transform_0, window_bounds = array<i64: 2, 128>}, {pipeline_mode = #tpu.pipeline_mode<synchronous>, transform_indices = @transform_1, window_bounds = array<i64: 18, 80>}, {transform_indices = @transform_2, window_bounds = array<i64: 1>}, {transform_indices = @transform_3, window_bounds = array<i64: 1>}, {transform_indices = @transform_4, window_bounds = array<i64: 1, 128>}]} {
    %c0 = arith.constant 0 : index
    %c0_0 = arith.constant 0 : index
    %0 = vector.load %arg1[%c0, %c0_0] : memref<2x128xi32, #tpu.memory_space<vmem>>, vector<2x128xi32>
    %1 = vector.extract_strided_slice %0 {offsets = [0, 0], sizes = [1, 128], strides = [1, 1]} : vector<2x128xi32> to vector<1x128xi32>
    %2 = vector.extract_strided_slice %0 {offsets = [1, 0], sizes = [1, 128], strides = [1, 1]} : vector<2x128xi32> to vector<1x128xi32>
    %3 = tpu.iota {dimensions = array<i32: 0>} : vector<80x128xi32>
    %4 = vector.broadcast %1 : vector<1x128xi32> to vector<80x128xi32>
    %5 = arith.cmpi eq, %3, %4 : vector<80x128xi32>
    %c64_i32 = arith.constant 64 : i32
    %6 = vector.broadcast %c64_i32 : i32 to vector<1x128xi32>
    %7 = arith.addi %2, %6 : vector<1x128xi32>
    %8 = vector.broadcast %7 : vector<1x128xi32> to vector<80x128xi32>
    %9 = arith.cmpi eq, %3, %8 : vector<80x128xi32>
    %10 = arith.ori %5, %9 : vector<80x128xi1>
    %11 = arith.extui %10 : vector<80x128xi1> to vector<80x128xi32>
    %12 = arith.sitofp %11 : vector<80x128xi32> to vector<80x128xf32>
    %c0_1 = arith.constant 0 : index
    %c0_2 = arith.constant 0 : index
    %13 = vector.load %arg2[%c0_1, %c0_2] : memref<18x80xf32, #tpu.memory_space<vmem>>, vector<18x80xf32>
    %cst = arith.constant dense<0.000000e+00> : vector<18x128xf32>
    %14 = tpu.matmul %13, %12, %cst {dimension_numbers = #tpu.dot_dimension_numbers<[1], [0], [0], [1], [0, 0, 1, 1], [], []>, precision = #tpu.contract_precision<fp32>} : vector<18x80xf32>, vector<80x128xf32>, vector<18x128xf32> -> vector<18x128xf32>
    %15 = vector.extract_strided_slice %14 {offsets = [0, 0], sizes = [16, 128], strides = [1, 1]} : vector<18x128xf32> to vector<16x128xf32>
    %16 = vector.extract_strided_slice %14 {offsets = [16, 0], sizes = [1, 128], strides = [1, 1]} : vector<18x128xf32> to vector<1x128xf32>
    %17 = vector.extract_strided_slice %14 {offsets = [17, 0], sizes = [1, 128], strides = [1, 1]} : vector<18x128xf32> to vector<1x128xf32>
    %18 = vector.extract_strided_slice %12 {offsets = [64, 0], sizes = [16, 128], strides = [1, 1]} : vector<80x128xf32> to vector<16x128xf32>
    %19 = arith.mulf %15, %18 : vector<16x128xf32>
    %cst_3 = arith.constant dense<0.000000e+00> : vector<128xf32>
    %20 = vector.multi_reduction <add>, %19, %cst_3 [0] : vector<16x128xf32> to vector<128xf32>
    %21 = vector.shape_cast %20 : vector<128xf32> to vector<1x128xf32>
    %22 = arith.mulf %16, %17 : vector<1x128xf32>
    %cst_4 = arith.constant 9.99999993E-9 : f32
    %cst_5 = arith.constant 9.99999993E-9 : f32
    %23 = arith.mulf %cst_4, %cst_5 : f32
    %24 = vector.broadcast %23 : f32 to vector<1x128xf32>
    %25 = arith.maximumf %22, %24 : vector<1x128xf32>
    %26 = math.rsqrt %25 : vector<1x128xf32>
    %27 = arith.mulf %21, %26 : vector<1x128xf32>
    %c0_6 = arith.constant 0 : index
    %28 = memref.load %arg3[%c0_6] : memref<1xf32, #tpu.memory_space<smem>>
    %29 = vector.broadcast %28 : f32 to vector<1x128xf32>
    %30 = arith.mulf %27, %29 : vector<1x128xf32>
    %c0_7 = arith.constant 0 : index
    %31 = memref.load %arg4[%c0_7] : memref<1xf32, #tpu.memory_space<smem>>
    %32 = vector.broadcast %31 : f32 to vector<1x128xf32>
    %33 = arith.addf %30, %32 : vector<1x128xf32>
    %34 = arith.negf %33 : vector<1x128xf32>
    %35 = math.exp %34 : vector<1x128xf32>
    %cst_8 = arith.constant 1.000000e+00 : f32
    %36 = vector.broadcast %cst_8 : f32 to vector<1x128xf32>
    %37 = arith.addf %36, %35 : vector<1x128xf32>
    %38 = arith.divf %36, %37 : vector<1x128xf32>
    %c0_9 = arith.constant 0 : index
    %c0_10 = arith.constant 0 : index
    %39 = vector.load %arg5[%c0_9, %c0_10] : memref<1x128xf32, #tpu.memory_space<vmem>>, vector<1x128xf32>
    tpu.vector_store %arg5[%c0_9, %c0_10], %38 {strides = array<i32>} : memref<1x128xf32, #tpu.memory_space<vmem>>, vector<1x128xf32>,
    return
  }
  func.func @transform_0(%arg0: i32) -> (i32, i32) {
    %c0_i32 = arith.constant 0 : i32
    %c0_i32_0 = arith.constant 0 : i32
    return %c0_i32, %arg0 : i32, i32
  }
  func.func @transform_1(%arg0: i32) -> (i32, i32) {
    %c0_i32 = arith.constant 0 : i32
    %c0_i32_0 = arith.constant 0 : i32
    %c0_i32_1 = arith.constant 0 : i32
    return %c0_i32, %c0_i32_0 : i32, i32
  }
  func.func @transform_2(%arg0: i32) -> i32 {
    %c0_i32 = arith.constant 0 : i32
    %c0_i32_0 = arith.constant 0 : i32
    return %c0_i32 : i32
  }
  func.func @transform_3(%arg0: i32) -> i32 {
    %c0_i32 = arith.constant 0 : i32
    %c0_i32_0 = arith.constant 0 : i32
    return %c0_i32 : i32
  }
  func.func @transform_4(%arg0: i32) -> (i32, i32) {
    %c0_i32 = arith.constant 0 : i32
    %c0_i32_0 = arith.constant 0 : i32
    return %c0_i32, %arg0 : i32, i32
  }
}

</mosaic_0001>

<llo_original>
// kernel: tpu_custom_call.1
$region0: #{tpu_custom_call.1}
  #allocation0 [shape = 'u32[]', space=smem, size = 0x4, offset = 0x4, fixed_abs, tag = 'smem constant byte address 0x4 - core index']
  #allocation1 [shape = 'u32[144,128]{1,0:T(1,128)}', space=vmem, size = 0x12000, scoped, tag = 'internal scratch']
  #allocation2 [shape = 'f32[1]{0:T(128)S(6)}', space=smem, size = 0x200, scoped, tag = 'scoped memory for tpu_custom_call.1']
  #allocation3 [shape = 'f32[1]{0:T(128)S(6)}', space=smem, size = 0x200, scoped, tag = 'scoped memory for tpu_custom_call.1']
  %s0 = inlined_call_operand.vmem [shape: s32[2,256], index: 0, kind: input, shape index: {}]
  %s1 = inlined_call_operand.hbm [shape: f32[18,80], index: 1, kind: input, shape index: {}]
  %s2 = inlined_call_operand.<no memory space> [shape: f32[1], index: 2, kind: input, shape index: {}]
  %s3 = inlined_call_operand.<no memory space> [shape: f32[1], index: 3, kind: input, shape index: {}]
  %s4 = inlined_call_operand.hbm [shape: f32[1,256], index: 4, kind: output, shape index: {}]
  %s5 = sld [smem:[#allocation0]]
  $region53: #{tpu_custom_call.1} parent=0
    _
  %s7 = ssub.s32 1, %s5
  %s8 = scalar_select 0, %s7, %s5
  %9 = sst [smem:[#allocation2]] %s2
  %10 = sst [smem:[#allocation3]] %s3
  $region1: #{tpu_custom_call.1} parent=0
    #allocation4 [shape = 'u8[12288]{0}', space=vmem, size = 0x3000, scoped, tag = 'input window, operand 1, single buffered']
    #allocation5 [shape = 's32[2]{0}', space=sflag, size = 0x8, scoped, tag = 'scoped memory for tpu_custom_call.1']
    #allocation6 [shape = 's32[2]{0}', space=sflag, size = 0x8, scoped, tag = 'scoped memory for tpu_custom_call.1']
    #allocation7 [shape = 'u8[1024]{0}', space=vmem, size = 0x400, scoped, tag = 'output window, operand 0']
    %11 = vsyncpa [#allocation5], 0
    %12 = vsyncpa [#allocation6], 0
    %s13 = scalar_lea.sflag [#allocation6], 1
    %14 = vsyncpa %s13, 0
    loop: start=0, step=1, limit=4
    $region2: #{tpu_custom_call.1} parent=1 // loop_pre_header
      _
    $region3: #{tpu_custom_call.1} parent=1 // loop_header
      %s16 = sphi 0, %s20
      %p17 = scmp.ge.s32.totalorder %s16, 4
      %s26 = sphi 0, %s28
      %s29 = sphi 0, %s26
      %s30 = sphi 0, %s29
      %s46 = sphi 0, %s30
      %s50 = sphi 0, %s50
      %s52 = sphi 0, %s50
      %s53 = sphi 0, %s52
      %s67 = sphi 0, %s53
      %s71 = sphi 0, %s71
      %s73 = sphi 0, %s71
      %s74 = sphi 0, %s73
      %s88 = sphi 0, %s74
      %s92 = sphi 0, %s92
      %s94 = sphi 0, %s92
      %s95 = sphi 0, %s94
      %s109 = sphi 0, %s95
      %s115 = sphi 0, %s117
      %s118 = sphi 0, %s115
      %s119 = sphi 0, %s118
      %s135 = sphi 0, %s119
    $region4: #{tpu_custom_call.1} parent=1 // loop_header_branch
      %19 = sbr.rel (%p17) target = $region8
    $region5: #{tpu_custom_call.1} parent=1 // loop_body
      %s21 = ssub.s32 %s16, 1
      %s22 = ssub.s32 %s16, 2
      %s23 = sadd.s32 %s16, 1
      %s24 = ssub.s32 %s16, %s23
      %p25 = scmp.eq.s32.totalorder %s24, 0
      %s27 = sadd.s32 %s26, 1
      %s28 = scalar_select %p25, %s26, %s27
      %p31 = pneg %p25
      %p32 = scmp.eq.s32.totalorder %s16, 1
      %p33 = por %p31, %p32
      %p34 = scmp.ne.s32.totalorder %s26, %s29
      %p35 = scmp.eq.s32.totalorder %s16, 0
      %p36 = por %p34, %p35
      %p37 = scmp.ne.s32.totalorder %s26, %s29
      %p38 = scmp.eq.s32.totalorder %s21, 1
      %p39 = por %p37, %p38
      %p40 = scmp.ne.s32.totalorder %s29, %s30
      %p41 = scmp.eq.s32.totalorder %s21, 0
      %p42 = por %p40, %p41
      %p43 = scmp.ne.s32.totalorder %s29, %s30
      %p44 = scmp.eq.s32.totalorder %s22, 1
      %p45 = por %p43, %p44
      %p47 = scmp.ne.s32.totalorder %s30, %s46
      %p48 = scmp.eq.s32.totalorder %s22, 0
      %p49 = por %p47, %p48
      %s51 = sadd.s32 %s50, 1
      %p54 = scmp.eq.s32.totalorder %s16, 1
      %p55 = scmp.ne.s32.totalorder %s50, %s52
      %p56 = scmp.eq.s32.totalorder %s16, 0
      %p57 = por %p55, %p56
      %p58 = scmp.ne.s32.totalorder %s50, %s52
      %p59 = scmp.eq.s32.totalorder %s21, 1
      %p60 = por %p58, %p59
      %p61 = scmp.ne.s32.totalorder %s52, %s53
      %p62 = scmp.eq.s32.totalorder %s21, 0
      %p63 = por %p61, %p62
      %p64 = scmp.ne.s32.totalorder %s52, %s53
      %p65 = scmp.eq.s32.totalorder %s22, 1
      %p66 = por %p64, %p65
      %p68 = scmp.ne.s32.totalorder %s53, %s67
      %p69 = scmp.eq.s32.totalorder %s22, 0
      %p70 = por %p68, %p69
      %s72 = sadd.s32 %s71, 1
      %p75 = scmp.eq.s32.totalorder %s16, 1
      %p76 = scmp.ne.s32.totalorder %s71, %s73
      %p77 = scmp.eq.s32.totalorder %s16, 0
      %p78 = por %p76, %p77
      %p79 = scmp.ne.s32.totalorder %s71, %s73
      %p80 = scmp.eq.s32.totalorder %s21, 1
      %p81 = por %p79, %p80
      %p82 = scmp.ne.s32.totalorder %s73, %s74
      %p83 = scmp.eq.s32.totalorder %s21, 0
      %p84 = por %p82, %p83
      %p85 = scmp.ne.s32.totalorder %s73, %s74
      %p86 = scmp.eq.s32.totalorder %s22, 1
      %p87 = por %p85, %p86
      %p89 = scmp.ne.s32.totalorder %s74, %s88
      %p90 = scmp.eq.s32.totalorder %s22, 0
      %p91 = por %p89, %p90
      %s93 = sadd.s32 %s92, 1
      %p96 = scmp.eq.s32.totalorder %s16, 1
      %p97 = scmp.ne.s32.totalorder %s92, %s94
      %p98 = scmp.eq.s32.totalorder %s16, 0
      %p99 = por %p97, %p98
      %p100 = scmp.ne.s32.totalorder %s92, %s94
      %p101 = scmp.eq.s32.totalorder %s21, 1
      %p102 = por %p100, %p101
      %p103 = scmp.ne.s32.totalorder %s94, %s95
      %p104 = scmp.eq.s32.totalorder %s21, 0
      %p105 = por %p103, %p104
      %p106 = scmp.ne.s32.totalorder %s94, %s95
      %p107 = scmp.eq.s32.totalorder %s22, 1
      %p108 = por %p106, %p107
      %p110 = scmp.ne.s32.totalorder %s95, %s109
      %p111 = scmp.eq.s32.totalorder %s22, 0
      %p112 = por %p110, %p111
      %s113 = ssub.s32 %s16, %s23
      %p114 = scmp.eq.s32.totalorder %s113, 0
      %s116 = sadd.s32 %s115, 1
      %s117 = scalar_select %p114, %s115, %s116
      %p120 = pneg %p114
      %p121 = scmp.eq.s32.totalorder %s16, 1
      %p122 = por %p120, %p121
      %p123 = scmp.ne.s32.totalorder %s115, %s118
      %p124 = scmp.eq.s32.totalorder %s16, 0
      %p125 = por %p123, %p124
      %p126 = scmp.ne.s32.totalorder %s115, %s118
      %p127 = scmp.eq.s32.totalorder %s21, 1
      %p128 = por %p126, %p127
      %p129 = scmp.ne.s32.totalorder %s118, %s119
      %p130 = scmp.eq.s32.totalorder %s21, 0
      %p131 = por %p129, %p130
      %p132 = scmp.ne.s32.totalorder %s118, %s119
      %p133 = scmp.eq.s32.totalorder %s22, 1
      %p134 = por %p132, %p133
      %p136 = scmp.ne.s32.totalorder %s119, %s135
      %p137 = scmp.eq.s32.totalorder %s22, 0
      %p138 = por %p136, %p137
      %p139 = scmp.le.s32.totalorder 1, %s16
      %p140 = scmp.lt.s32.totalorder %s16, 3
      %p141 = pnand %p139, %p140
      %p142 = pneg %p141
      // Predicated region
      $region9: #{tpu_custom_call.1} parent=5 // pred_check
        _
      $region10: #{tpu_custom_call.1} parent=5 // pred_check_branch
        %144 = sbr.rel (%p141) target = $region12
      $region11: #{tpu_custom_call.1} parent=5 // pred_region
        %s145 = ssub.s32 %s16, 1
        // Predicated region
        $region13: #{tpu_custom_call.1} parent=11 // pred_check
          %p146 = pneg %p63
        $region14: #{tpu_custom_call.1} parent=11 // pred_check_branch
          %148 = sbr.rel (%p146) target = $region16
        $region15: #{tpu_custom_call.1} parent=11 // pred_region
          %s150 = ssub.s32 384, 384
          %151 = vsyncadd [#allocation5], %s150
          %s152 = sshll.u32 [#allocation4], 4
          %s153 = int_to_ptr.vmem [resolvable:$true] %s152
          %158 = dma.hbm_to_vmem [thread:$0]  %s1, 384, %s153, [#allocation5], 128, 128, 8
        $region16: #{tpu_custom_call.1} parent=11 // pred_fallthru
          _
        // Predicated region
        $region17: #{tpu_custom_call.1} parent=11 // pred_check
          %p159 = pneg %p84
        $region18: #{tpu_custom_call.1} parent=11 // pred_check_branch
          %161 = sbr.rel (%p159) target = $region20
        $region19: #{tpu_custom_call.1} parent=11 // pred_region
          _
        $region20: #{tpu_custom_call.1} parent=11 // pred_fallthru
          _
        // Predicated region
        $region21: #{tpu_custom_call.1} parent=11 // pred_check
          %p162 = pneg %p105
        $region22: #{tpu_custom_call.1} parent=11 // pred_check_branch
          %164 = sbr.rel (%p162) target = $region24
        $region23: #{tpu_custom_call.1} parent=11 // pred_region
          _
        $region24: #{tpu_custom_call.1} parent=11 // pred_fallthru
          _
      $region12: #{tpu_custom_call.1} parent=5 // pred_fallthru
        _
      %p165 = scmp.lt.s32.totalorder %s16, 2
      // Predicated region
      $region25: #{tpu_custom_call.1} parent=5 // pred_check
        %p166 = pneg %p165
      $region26: #{tpu_custom_call.1} parent=5 // pred_check_branch
        %168 = sbr.rel (%p166) target = $region28
      $region27: #{tpu_custom_call.1} parent=5 // pred_region
        // Predicated region
        $region29: #{tpu_custom_call.1} parent=27 // pred_check
          %p169 = pneg %p36
        $region30: #{tpu_custom_call.1} parent=27 // pred_check_branch
          %171 = sbr.rel (%p169) target = $region32
        $region31: #{tpu_custom_call.1} parent=27 // pred_region
          %p172 = scmp.lt.s32.totalorder %s16, 1
          %s173 = scalar_select %p172, %s16, 1
          %s174 = smul.addr %s173, 2
          %s175 = scalar_lea.vmem %s0, %s174
        $region32: #{tpu_custom_call.1} parent=27 // pred_fallthru
          _
      $region28: #{tpu_custom_call.1} parent=5 // pred_fallthru
        _
      %p176 = scmp.le.s32.totalorder 1, %s16
      %p177 = scmp.lt.s32.totalorder %s16, 3
      %p178 = pnand %p176, %p177
      %p179 = pneg %p178
      // Predicated region
      $region33: #{tpu_custom_call.1} parent=5 // pred_check
        _
      $region34: #{tpu_custom_call.1} parent=5 // pred_check_branch
        %181 = sbr.rel (%p178) target = $region36
      $region35: #{tpu_custom_call.1} parent=5 // pred_region
        %s182 = ssub.s32 %s16, 1
        // Predicated region
        $region37: #{tpu_custom_call.1} parent=35 // pred_check
          %p183 = pneg %p63
        $region38: #{tpu_custom_call.1} parent=35 // pred_check_branch
          %185 = sbr.rel (%p183) target = $region40
        $region39: #{tpu_custom_call.1} parent=35 // pred_region
          %186 = dma.done [#allocation5], 384
        $region40: #{tpu_custom_call.1} parent=35 // pred_fallthru
          _
        %p187 = scmp.lt.s32.totalorder %s21, 1
        %s188 = scalar_select %p187, %s21, 1
        %s189 = smul.addr %s188, 2
        %s190 = scalar_lea.vmem %s0, %s189
        %p191 = pneg %p42
        %p192 = pneg %p39
        %p193 = pneg %p63
        %p194 = pneg %p60
        %p195 = pneg %p84
        %p196 = pneg %p81
        %p197 = pneg %p105
        %p198 = pneg %p102
        %p199 = pneg %p131
        %p200 = pneg %p128
        %s201 = sand.u32 %s118, 1
        %s202 = scalar_lea.sflag [#allocation6], %s201
        %s203 = sand.u32 %s118, 1
        %s204 = scalar_lea.vmem [#allocation7], %s203
        %p205 = scmp.lt.s32.totalorder %s21, 1
        %s206 = scalar_select %p205, %s21, 1
        %s207 = smul.addr %s206, 2
        %s208 = scalar_lea.vmem %s0, %s207
        %v209 = vld [vmem:[%s208] sm:$0x3]
        %v210 = vlaneseq
        %v211 = vshrl.u32 %v210, 7
        %v212 = vadd.s32 %v211, 8
        %v213 = vadd.s32 %v211, 16
        %v214 = vadd.s32 %v211, 24
        %v215 = vadd.s32 %v211, 32
        %v216 = vadd.s32 %v211, 40
        %v217 = vadd.s32 %v211, 48
        %v218 = vadd.s32 %v211, 56
        %v219 = vadd.s32 %v211, 64
        %v220 = vadd.s32 %v211, 72
        %v221 = vlaneseq
        %v222 = vshrl.u32 %v221, 7
        %v223 = vsub.s32 0, %v222
        %v224 = vrot.slane %v209, %v223
        %vm225 = vcmp.eq.s32.totalorder %v211, %v224
        %vm226 = vcmp.eq.s32.totalorder %v212, %v224
        %vm227 = vcmp.eq.s32.totalorder %v213, %v224
        %vm228 = vcmp.eq.s32.totalorder %v214, %v224
        %vm229 = vcmp.eq.s32.totalorder %v215, %v224
        %vm230 = vcmp.eq.s32.totalorder %v216, %v224
        %vm231 = vcmp.eq.s32.totalorder %v217, %v224
        %vm232 = vcmp.eq.s32.totalorder %v218, %v224
        %vm233 = vcmp.eq.s32.totalorder %v219, %v224
        %vm234 = vcmp.eq.s32.totalorder %v220, %v224
        %v235 = vadd.s32 %v209, 64
        %v236 = vlaneseq
        %v237 = vshrl.u32 %v236, 7
        %v238 = vsub.s32 1, %v237
        %v239 = vrot.slane %v235, %v238
        %vm240 = vcmp.eq.s32.totalorder %v211, %v239
        %vm241 = vcmp.eq.s32.totalorder %v212, %v239
        %vm242 = vcmp.eq.s32.totalorder %v213, %v239
        %vm243 = vcmp.eq.s32.totalorder %v214, %v239
        %vm244 = vcmp.eq.s32.totalorder %v215, %v239
        %vm245 = vcmp.eq.s32.totalorder %v216, %v239
        %vm246 = vcmp.eq.s32.totalorder %v217, %v239
        %vm247 = vcmp.eq.s32.totalorder %v218, %v239
        %vm248 = vcmp.eq.s32.totalorder %v219, %v239
        %vm249 = vcmp.eq.s32.totalorder %v220, %v239
        %vm250 = vmor %vm225, %vm240
        %vm251 = vmor %vm226, %vm241
        %vm252 = vmor %vm227, %vm242
        %vm253 = vmor %vm228, %vm243
        %vm254 = vmor %vm229, %vm244
        %vm255 = vmor %vm230, %vm245
        %vm256 = vmor %vm231, %vm246
        %vm257 = vmor %vm232, %vm247
        %vm258 = vmor %vm233, %vm248
        %vm259 = vmor %vm234, %vm249
        %v260 = vsel %vm250, 1, 0
        %v261 = vsel %vm251, 1, 0
        %v262 = vsel %vm252, 1, 0
        %v263 = vsel %vm253, 1, 0
        %v264 = vsel %vm254, 1, 0
        %v265 = vsel %vm255, 1, 0
        %v266 = vsel %vm256, 1, 0
        %v267 = vsel %vm257, 1, 0
        %v268 = vsel %vm258, 1, 0
        %v269 = vsel %vm259, 1, 0
        %v270 = vcvt.s32.f32 %v260
        %v271 = vcvt.s32.f32 %v261
        %v272 = vcvt.s32.f32 %v262
        %v273 = vcvt.s32.f32 %v263
        %v274 = vcvt.s32.f32 %v264
        %v275 = vcvt.s32.f32 %v265
        %v276 = vcvt.s32.f32 %v266
        %v277 = vcvt.s32.f32 %v267
        %v278 = vcvt.s32.f32 %v268
        %v279 = vcvt.s32.f32 %v269
        %v280 = vld [vmem:[#allocation4] sm:$0xff]
        %v281 = vld [vmem:[#allocation4 + $0x8] sm:$0xff]
        %v282 = vld [vmem:[#allocation4 + $0x10] sm:$0x3]
        %vm283 = vcmask 654336
        %v285 = vsel %vm283, %v280, 0
        %v288 = vsel %vm283, %v281, 0
        %v291 = vsel %vm283, %v282, 0
        %293 = vmatprep.subr.mxu0 0.0
        %v294 = vand.u32 %v270, 4294901760
        %295 = vmatpush1.msra.mxu0 %v294
        %296 = vmatprep.subr.mxu0 0.0
        %v297 = vand.u32 %v271, 4294901760
        %298 = vmatpush1.msra.mxu0 %v297
        %299 = vmatprep.subr.mxu0 0.0
        %v300 = vand.u32 %v272, 4294901760
        %301 = vmatpush1.msra.mxu0 %v300
        %302 = vmatprep.subr.mxu0 0.0
        %v303 = vand.u32 %v273, 4294901760
        %304 = vmatpush1.msra.mxu0 %v303
        %305 = vmatprep.subr.mxu0 0.0
        %v306 = vand.u32 %v274, 4294901760
        %307 = vmatpush1.msra.mxu0 %v306
        %308 = vmatprep.subr.mxu0 0.0
        %v309 = vand.u32 %v275, 4294901760
        %310 = vmatpush1.msra.mxu0 %v309
        %311 = vmatprep.subr.mxu0 0.0
        %v312 = vand.u32 %v276, 4294901760
        %313 = vmatpush1.msra.mxu0 %v312
        %314 = vmatprep.subr.mxu0 0.0
        %v315 = vand.u32 %v277, 4294901760
        %316 = vmatpush1.msra.mxu0 %v315
        %317 = vmatprep.subr.mxu0 0.0
        %v318 = vand.u32 %v278, 4294901760
        %319 = vmatpush1.msra.mxu0 %v318
        %320 = vmatprep.subr.mxu0 0.0
        %v321 = vand.u32 %v279, 4294901760
        %322 = vmatpush1.msra.mxu0 %v321
        %323 = vmatprep.subr.mxu0 0.0
        %324 = vmatpush1.msra.mxu0 0.0
        %325 = vmatprep.subr.mxu0 0.0
        %326 = vmatpush1.msra.mxu0 0.0
        %327 = vmatprep.subr.mxu0 0.0
        %328 = vmatpush1.msra.mxu0 0.0
        %329 = vmatprep.subr.mxu0 0.0
        %330 = vmatpush1.msra.mxu0 0.0
        %331 = vmatprep.subr.mxu0 0.0
        %332 = vmatpush1.msra.mxu0 0.0
        %333 = vmatprep.subr.mxu0 0.0
        %334 = vmatpush1.msra.mxu0 0.0
        %335 = vmatprep.subr.mxu0 0.0
        %336 = vmatpush1.msra.mxu0 0.0
        %337 = vmatprep.subr.mxu0 0.0
        %338 = vmatpush1.msra.mxu0 0.0
        %339 = vmatprep.subr.mxu0 0.0
        %340 = vmatpush1.msra.mxu0 0.0
        %341 = vmatprep.subr.mxu0 0.0
        %342 = vmatpush1.msra.mxu0 0.0
        %343 = vmatprep.subr.mxu0 0.0
        %344 = vmatpush1.msra.mxu0 0.0
        %345 = vmatprep.subr.mxu0 0.0
        %346 = vmatpush1.msra.mxu0 0.0
        %347 = vmatprep.subr.mxu0 0.0
        %348 = vmatpush1.msra.mxu0 0.0
        %349 = vmatprep.subr.mxu0 0.0
        %350 = vmatpush1.msra.mxu0 0.0
        %351 = vmatprep.subr.mxu0 0.0
        %352 = vmatpush1.msra.mxu0 0.0
        %353 = vmatprep.subr.mxu0 0.0
        %354 = vmatpush1.msra.mxu0 0.0
        %355 = vmatprep.subr.mxu0 0.0
        %356 = vmatpush1.msra.mxu0 0.0
        %357 = vmatprep.subr.mxu0 0.0
        %358 = vmatpush1.msra.mxu0 0.0
        %359 = vmatprep.subr.mxu0 0.0
        %360 = vmatpush1.msra.mxu0 0.0
        %361 = vmatprep.subr.mxu0 0.0
        %362 = vmatpush1.msra.mxu0 0.0
        %363 = vmatprep.subr.mxu0 0.0
        %364 = vmatpush1.msra.mxu0 0.0
        %365 = vmatprep.subr.mxu0 0.0
        %366 = vmatpush1.msra.mxu0 0.0
        %367 = vmatprep.mubr.f32.mxu0 0.0
        %v368 = vand.u32 %v285, 4294901760
        %v369 = vsub.f32 %v285, %v368
        %v370 = vand.u32 %v369, 4294901760
        %v371 = vsub.f32 %v369, %v370
        %v372 = vand.u32 %v371, 4294901760
        %373 = vmatmul.mubr.f32.gmra.mrb[0].mxu0 %v372
        %v374 = vpop.f32.mrb[0].mxu0
        %v375 = vadd.f32 0.0, %v374
        %v376 = vpop.f32.mrb[0].mxu0
        %377 = vmatprep.mubr.f32.mxu0 0.0
        %v378 = vand.u32 %v288, 4294901760
        %v379 = vsub.f32 %v288, %v378
        %v380 = vand.u32 %v379, 4294901760
        %v381 = vsub.f32 %v379, %v380
        %v382 = vand.u32 %v381, 4294901760
        %383 = vmatmul.mubr.f32.gmra.mrb[0].mxu0 %v382
        %v384 = vpop.f32.mrb[0].mxu0
        %v385 = vadd.f32 0.0, %v384
        %v386 = vpop.f32.mrb[0].mxu0
        %387 = vmatprep.mubr.f32.mxu0 0.0
        %v388 = vand.u32 %v291, 4294901760
        %v389 = vsub.f32 %v291, %v388
        %v390 = vand.u32 %v389, 4294901760
        %v391 = vsub.f32 %v389, %v390
        %v392 = vand.u32 %v391, 4294901760
        %393 = vmatmul.mubr.f32.gmra.mrb[0].mxu0 %v392
        %v394 = vpop.f32.mrb[0].mxu0
        %v395 = vadd.f32 0.0, %v394
        %v396 = vpop.f32.mrb[0].mxu0
        %397 = vdwg.mxu0
        %398 = vmatprep.subr.mxu0 0.0
        %v399 = vand.u32 %v270, 4294901760
        %v400 = vsub.f32 %v270, %v399
        %v401 = vand.u32 %v400, 4294901760
        %v402 = vsub.f32 %v400, %v401
        %v403 = vand.u32 %v402, 4294901760
        %404 = vmatpush1.msra.mxu0 %v403
        %405 = vmatprep.subr.mxu0 0.0
        %v406 = vand.u32 %v271, 4294901760
        %v407 = vsub.f32 %v271, %v406
        %v408 = vand.u32 %v407, 4294901760
        %v409 = vsub.f32 %v407, %v408
        %v410 = vand.u32 %v409, 4294901760
        %411 = vmatpush1.msra.mxu0 %v410
        %412 = vmatprep.subr.mxu0 0.0
        %v413 = vand.u32 %v272, 4294901760
        %v414 = vsub.f32 %v272, %v413
        %v415 = vand.u32 %v414, 4294901760
        %v416 = vsub.f32 %v414, %v415
        %v417 = vand.u32 %v416, 4294901760
        %418 = vmatpush1.msra.mxu0 %v417
        %419 = vmatprep.subr.mxu0 0.0
        %v420 = vand.u32 %v273, 4294901760
        %v421 = vsub.f32 %v273, %v420
        %v422 = vand.u32 %v421, 4294901760
        %v423 = vsub.f32 %v421, %v422
        %v424 = vand.u32 %v423, 4294901760
        %425 = vmatpush1.msra.mxu0 %v424
        %426 = vmatprep.subr.mxu0 0.0
        %v427 = vand.u32 %v274, 4294901760
        %v428 = vsub.f32 %v274, %v427
        %v429 = vand.u32 %v428, 4294901760
        %v430 = vsub.f32 %v428, %v429
        %v431 = vand.u32 %v430, 4294901760
        %432 = vmatpush1.msra.mxu0 %v431
        %433 = vmatprep.subr.mxu0 0.0
        %v434 = vand.u32 %v275, 4294901760
        %v435 = vsub.f32 %v275, %v434
        %v436 = vand.u32 %v435, 4294901760
        %v437 = vsub.f32 %v435, %v436
        %v438 = vand.u32 %v437, 4294901760
        %439 = vmatpush1.msra.mxu0 %v438
        %440 = vmatprep.subr.mxu0 0.0
        %v441 = vand.u32 %v276, 4294901760
        %v442 = vsub.f32 %v276, %v441
        %v443 = vand.u32 %v442, 4294901760
        %v444 = vsub.f32 %v442, %v443
        %v445 = vand.u32 %v444, 4294901760
        %446 = vmatpush1.msra.mxu0 %v445
        %447 = vmatprep.subr.mxu0 0.0
        %v448 = vand.u32 %v277, 4294901760
        %v449 = vsub.f32 %v277, %v448
        %v450 = vand.u32 %v449, 4294901760
        %v451 = vsub.f32 %v449, %v450
        %v452 = vand.u32 %v451, 4294901760
        %453 = vmatpush1.msra.mxu0 %v452
        %454 = vmatprep.subr.mxu0 0.0
        %v455 = vand.u32 %v278, 4294901760
        %v456 = vsub.f32 %v278, %v455
        %v457 = vand.u32 %v456, 4294901760
        %v458 = vsub.f32 %v456, %v457
        %v459 = vand.u32 %v458, 4294901760
        %460 = vmatpush1.msra.mxu0 %v459
        %461 = vmatprep.subr.mxu0 0.0
        %v462 = vand.u32 %v279, 4294901760
        %v463 = vsub.f32 %v279, %v462
        %v464 = vand.u32 %v463, 4294901760
        %v465 = vsub.f32 %v463, %v464
        %v466 = vand.u32 %v465, 4294901760
        %467 = vmatpush1.msra.mxu0 %v466
        %468 = vmatprep.subr.mxu0 0.0
        %469 = vmatpush1.msra.mxu0 0.0
        %470 = vmatprep.subr.mxu0 0.0
        %471 = vmatpush1.msra.mxu0 0.0
        %472 = vmatprep.subr.mxu0 0.0
        %473 = vmatpush1.msra.mxu0 0.0
        %474 = vmatprep.subr.mxu0 0.0
        %475 = vmatpush1.msra.mxu0 0.0
        %476 = vmatprep.subr.mxu0 0.0
        %477 = vmatpush1.msra.mxu0 0.0
        %478 = vmatprep.subr.mxu0 0.0
        %479 = vmatpush1.msra.mxu0 0.0
        %480 = vmatprep.subr.mxu0 0.0
        %481 = vmatpush1.msra.mxu0 0.0
        %482 = vmatprep.subr.mxu0 0.0
        %483 = vmatpush1.msra.mxu0 0.0
        %484 = vmatprep.subr.mxu0 0.0
        %485 = vmatpush1.msra.mxu0 0.0
        %486 = vmatprep.subr.mxu0 0.0
        %487 = vmatpush1.msra.mxu0 0.0
        %488 = vmatprep.subr.mxu0 0.0
        %489 = vmatpush1.msra.mxu0 0.0
        %490 = vmatprep.subr.mxu0 0.0
        %491 = vmatpush1.msra.mxu0 0.0
        %492 = vmatprep.subr.mxu0 0.0
        %493 = vmatpush1.msra.mxu0 0.0
        %494 = vmatprep.subr.mxu0 0.0
        %495 = vmatpush1.msra.mxu0 0.0
        %496 = vmatprep.subr.mxu0 0.0
        %497 = vmatpush1.msra.mxu0 0.0
        %498 = vmatprep.subr.mxu0 0.0
        %499 = vmatpush1.msra.mxu0 0.0
        %500 = vmatprep.subr.mxu0 0.0
        %501 = vmatpush1.msra.mxu0 0.0
        %502 = vmatprep.subr.mxu0 0.0
        %503 = vmatpush1.msra.mxu0 0.0
        %504 = vmatprep.subr.mxu0 0.0
        %505 = vmatpush1.msra.mxu0 0.0
        %506 = vmatprep.subr.mxu0 0.0
        %507 = vmatpush1.msra.mxu0 0.0
        %508 = vmatprep.subr.mxu0 0.0
        %509 = vmatpush1.msra.mxu0 0.0
        %510 = vmatprep.subr.mxu0 0.0
        %511 = vmatpush1.msra.mxu0 0.0
        %512 = vmatprep.mubr.f32.mxu0 0.0
        %v513 = vand.u32 %v285, 4294901760
        %514 = vmatmul.mubr.f32.gmra.mrb[0].mxu0 %v513
        %v515 = vpop.f32.mrb[0].mxu0
        %v516 = vadd.f32 %v375, %v515
        %v517 = vpop.f32.mrb[0].mxu0
        %518 = vmatprep.mubr.f32.mxu0 0.0
        %v519 = vand.u32 %v288, 4294901760
        %520 = vmatmul.mubr.f32.gmra.mrb[0].mxu0 %v519
        %v521 = vpop.f32.mrb[0].mxu0
        %v522 = vadd.f32 %v385, %v521
        %v523 = vpop.f32.mrb[0].mxu0
        %524 = vmatprep.mubr.f32.mxu0 0.0
        %v525 = vand.u32 %v291, 4294901760
        %526 = vmatmul.mubr.f32.gmra.mrb[0].mxu0 %v525
        %v527 = vpop.f32.mrb[0].mxu0
        %v528 = vadd.f32 %v395, %v527
        %v529 = vpop.f32.mrb[0].mxu0
        %530 = vdwg.mxu0
        %531 = vmatprep.subr.mxu0 0.0
        %v532 = vand.u32 %v270, 4294901760
        %v533 = vsub.f32 %v270, %v532
        %534 = vmatpush1.msra.mxu0 %v533
        %535 = vmatprep.subr.mxu0 0.0
        %v536 = vand.u32 %v271, 4294901760
        %v537 = vsub.f32 %v271, %v536
        %538 = vmatpush1.msra.mxu0 %v537
        %539 = vmatprep.subr.mxu0 0.0
        %v540 = vand.u32 %v272, 4294901760
        %v541 = vsub.f32 %v272, %v540
        %542 = vmatpush1.msra.mxu0 %v541
        %543 = vmatprep.subr.mxu0 0.0
        %v544 = vand.u32 %v273, 4294901760
        %v545 = vsub.f32 %v273, %v544
        %546 = vmatpush1.msra.mxu0 %v545
        %547 = vmatprep.subr.mxu0 0.0
        %v548 = vand.u32 %v274, 4294901760
        %v549 = vsub.f32 %v274, %v548
        %550 = vmatpush1.msra.mxu0 %v549
        %551 = vmatprep.subr.mxu0 0.0
        %v552 = vand.u32 %v275, 4294901760
        %v553 = vsub.f32 %v275, %v552
        %554 = vmatpush1.msra.mxu0 %v553
        %555 = vmatprep.subr.mxu0 0.0
        %v556 = vand.u32 %v276, 4294901760
        %v557 = vsub.f32 %v276, %v556
        %558 = vmatpush1.msra.mxu0 %v557
        %559 = vmatprep.subr.mxu0 0.0
        %v560 = vand.u32 %v277, 4294901760
        %v561 = vsub.f32 %v277, %v560
        %562 = vmatpush1.msra.mxu0 %v561
        %563 = vmatprep.subr.mxu0 0.0
        %v564 = vand.u32 %v278, 4294901760
        %v565 = vsub.f32 %v278, %v564
        %566 = vmatpush1.msra.mxu0 %v565
        %567 = vmatprep.subr.mxu0 0.0
        %v568 = vand.u32 %v279, 4294901760
        %v569 = vsub.f32 %v279, %v568
        %570 = vmatpush1.msra.mxu0 %v569
        %571 = vmatprep.subr.mxu0 0.0
        %572 = vmatpush1.msra.mxu0 0.0
        %573 = vmatprep.subr.mxu0 0.0
        %574 = vmatpush1.msra.mxu0 0.0
        %575 = vmatprep.subr.mxu0 0.0
        %576 = vmatpush1.msra.mxu0 0.0
        %577 = vmatprep.subr.mxu0 0.0
        %578 = vmatpush1.msra.mxu0 0.0
        %579 = vmatprep.subr.mxu0 0.0
        %580 = vmatpush1.msra.mxu0 0.0
        %581 = vmatprep.subr.mxu0 0.0
        %582 = vmatpush1.msra.mxu0 0.0
        %583 = vmatprep.subr.mxu0 0.0
        %584 = vmatpush1.msra.mxu0 0.0
        %585 = vmatprep.subr.mxu0 0.0
        %586 = vmatpush1.msra.mxu0 0.0
        %587 = vmatprep.subr.mxu0 0.0
        %588 = vmatpush1.msra.mxu0 0.0
        %589 = vmatprep.subr.mxu0 0.0
        %590 = vmatpush1.msra.mxu0 0.0
        %591 = vmatprep.subr.mxu0 0.0
        %592 = vmatpush1.msra.mxu0 0.0
        %593 = vmatprep.subr.mxu0 0.0
        %594 = vmatpush1.msra.mxu0 0.0
        %595 = vmatprep.subr.mxu0 0.0
        %596 = vmatpush1.msra.mxu0 0.0
        %597 = vmatprep.subr.mxu0 0.0
        %598 = vmatpush1.msra.mxu0 0.0
        %599 = vmatprep.subr.mxu0 0.0
        %600 = vmatpush1.msra.mxu0 0.0
        %601 = vmatprep.subr.mxu0 0.0
        %602 = vmatpush1.msra.mxu0 0.0
        %603 = vmatprep.subr.mxu0 0.0
        %604 = vmatpush1.msra.mxu0 0.0
        %605 = vmatprep.subr.mxu0 0.0
        %606 = vmatpush1.msra.mxu0 0.0
        %607 = vmatprep.subr.mxu0 0.0
        %608 = vmatpush1.msra.mxu0 0.0
        %609 = vmatprep.subr.mxu0 0.0
        %610 = vmatpush1.msra.mxu0 0.0
        %611 = vmatprep.subr.mxu0 0.0
        %612 = vmatpush1.msra.mxu0 0.0
        %613 = vmatprep.subr.mxu0 0.0
        %614 = vmatpush1.msra.mxu0 0.0
        %615 = vmatprep.mubr.f32.mxu0 0.0
        %v616 = vand.u32 %v285, 4294901760
        %v617 = vsub.f32 %v285, %v616
        %618 = vmatmul.mubr.f32.gmra.mrb[0].mxu0 %v617
        %v619 = vpop.f32.mrb[0].mxu0
        %v620 = vadd.f32 %v516, %v619
        %v621 = vpop.f32.mrb[0].mxu0
        %622 = vmatprep.mubr.f32.mxu0 0.0
        %v623 = vand.u32 %v288, 4294901760
        %v624 = vsub.f32 %v288, %v623
        %625 = vmatmul.mubr.f32.gmra.mrb[0].mxu0 %v624
        %v626 = vpop.f32.mrb[0].mxu0
        %v627 = vadd.f32 %v522, %v626
        %v628 = vpop.f32.mrb[0].mxu0
        %629 = vmatprep.mubr.f32.mxu0 0.0
        %v630 = vand.u32 %v291, 4294901760
        %v631 = vsub.f32 %v291, %v630
        %632 = vmatmul.mubr.f32.gmra.mrb[0].mxu0 %v631
        %v633 = vpop.f32.mrb[0].mxu0
        %v634 = vadd.f32 %v528, %v633
        %v635 = vpop.f32.mrb[0].mxu0
        %636 = vdwg.mxu0
        %637 = vmatprep.subr.mxu0 0.0
        %v638 = vand.u32 %v270, 4294901760
        %639 = vmatpush1.msra.mxu0 %v638
        %640 = vmatprep.subr.mxu0 0.0
        %v641 = vand.u32 %v271, 4294901760
        %642 = vmatpush1.msra.mxu0 %v641
        %643 = vmatprep.subr.mxu0 0.0
        %v644 = vand.u32 %v272, 4294901760
        %645 = vmatpush1.msra.mxu0 %v644
        %646 = vmatprep.subr.mxu0 0.0
        %v647 = vand.u32 %v273, 4294901760
        %648 = vmatpush1.msra.mxu0 %v647
        %649 = vmatprep.subr.mxu0 0.0
        %v650 = vand.u32 %v274, 4294901760
        %651 = vmatpush1.msra.mxu0 %v650
        %652 = vmatprep.subr.mxu0 0.0
        %v653 = vand.u32 %v275, 4294901760
        %654 = vmatpush1.msra.mxu0 %v653
        %655 = vmatprep.subr.mxu0 0.0
        %v656 = vand.u32 %v276, 4294901760
        %657 = vmatpush1.msra.mxu0 %v656
        %658 = vmatprep.subr.mxu0 0.0
        %v659 = vand.u32 %v277, 4294901760
        %660 = vmatpush1.msra.mxu0 %v659
        %661 = vmatprep.subr.mxu0 0.0
        %v662 = vand.u32 %v278, 4294901760
        %663 = vmatpush1.msra.mxu0 %v662
        %664 = vmatprep.subr.mxu0 0.0
        %v665 = vand.u32 %v279, 4294901760
        %666 = vmatpush1.msra.mxu0 %v665
        %667 = vmatprep.subr.mxu0 0.0
        %668 = vmatpush1.msra.mxu0 0.0
        %669 = vmatprep.subr.mxu0 0.0
        %670 = vmatpush1.msra.mxu0 0.0
        %671 = vmatprep.subr.mxu0 0.0
        %672 = vmatpush1.msra.mxu0 0.0
        %673 = vmatprep.subr.mxu0 0.0
        %674 = vmatpush1.msra.mxu0 0.0
        %675 = vmatprep.subr.mxu0 0.0
        %676 = vmatpush1.msra.mxu0 0.0
        %677 = vmatprep.subr.mxu0 0.0
        %678 = vmatpush1.msra.mxu0 0.0
        %679 = vmatprep.subr.mxu0 0.0
        %680 = vmatpush1.msra.mxu0 0.0
        %681 = vmatprep.subr.mxu0 0.0
        %682 = vmatpush1.msra.mxu0 0.0
        %683 = vmatprep.subr.mxu0 0.0
        %684 = vmatpush1.msra.mxu0 0.0
        %685 = vmatprep.subr.mxu0 0.0
        %686 = vmatpush1.msra.mxu0 0.0
        %687 = vmatprep.subr.mxu0 0.0
        %688 = vmatpush1.msra.mxu0 0.0
        %689 = vmatprep.subr.mxu0 0.0
        %690 = vmatpush1.msra.mxu0 0.0
        %691 = vmatprep.subr.mxu0 0.0
        %692 = vmatpush1.msra.mxu0 0.0
        %693 = vmatprep.subr.mxu0 0.0
        %694 = vmatpush1.msra.mxu0 0.0
        %695 = vmatprep.subr.mxu0 0.0
        %696 = vmatpush1.msra.mxu0 0.0
        %697 = vmatprep.subr.mxu0 0.0
        %698 = vmatpush1.msra.mxu0 0.0
        %699 = vmatprep.subr.mxu0 0.0
        %700 = vmatpush1.msra.mxu0 0.0
        %701 = vmatprep.subr.mxu0 0.0
        %702 = vmatpush1.msra.mxu0 0.0
        %703 = vmatprep.subr.mxu0 0.0
        %704 = vmatpush1.msra.mxu0 0.0
        %705 = vmatprep.subr.mxu0 0.0
        %706 = vmatpush1.msra.mxu0 0.0
        %707 = vmatprep.subr.mxu0 0.0
        %708 = vmatpush1.msra.mxu0 0.0
        %709 = vmatprep.subr.mxu0 0.0
        %710 = vmatpush1.msra.mxu0 0.0
        %711 = vmatprep.mubr.f32.mxu0 0.0
        %v712 = vand.u32 %v285, 4294901760
        %v713 = vsub.f32 %v285, %v712
        %v714 = vand.u32 %v713, 4294901760
        %715 = vmatmul.mubr.f32.gmra.mrb[0].mxu0 %v714
        %v716 = vpop.f32.mrb[0].mxu0
        %v717 = vadd.f32 %v620, %v716
        %v718 = vpop.f32.mrb[0].mxu0
        %719 = vmatprep.mubr.f32.mxu0 0.0
        %v720 = vand.u32 %v288, 4294901760
        %v721 = vsub.f32 %v288, %v720
        %v722 = vand.u32 %v721, 4294901760
        %723 = vmatmul.mubr.f32.gmra.mrb[0].mxu0 %v722
        %v724 = vpop.f32.mrb[0].mxu0
        %v725 = vadd.f32 %v627, %v724
        %v726 = vpop.f32.mrb[0].mxu0
        %727 = vmatprep.mubr.f32.mxu0 0.0
        %v728 = vand.u32 %v291, 4294901760
        %v729 = vsub.f32 %v291, %v728
        %v730 = vand.u32 %v729, 4294901760
        %731 = vmatmul.mubr.f32.gmra.mrb[0].mxu0 %v730
        %v732 = vpop.f32.mrb[0].mxu0
        %v733 = vadd.f32 %v634, %v732
        %v734 = vpop.f32.mrb[0].mxu0
        %735 = vdwg.mxu0
        %736 = vmatprep.subr.mxu0 0.0
        %v737 = vand.u32 %v270, 4294901760
        %v738 = vsub.f32 %v270, %v737
        %v739 = vand.u32 %v738, 4294901760
        %740 = vmatpush1.msra.mxu0 %v739
        %741 = vmatprep.subr.mxu0 0.0
        %v742 = vand.u32 %v271, 4294901760
        %v743 = vsub.f32 %v271, %v742
        %v744 = vand.u32 %v743, 4294901760
        %745 = vmatpush1.msra.mxu0 %v744
        %746 = vmatprep.subr.mxu0 0.0
        %v747 = vand.u32 %v272, 4294901760
        %v748 = vsub.f32 %v272, %v747
        %v749 = vand.u32 %v748, 4294901760
        %750 = vmatpush1.msra.mxu0 %v749
        %751 = vmatprep.subr.mxu0 0.0
        %v752 = vand.u32 %v273, 4294901760
        %v753 = vsub.f32 %v273, %v752
        %v754 = vand.u32 %v753, 4294901760
        %755 = vmatpush1.msra.mxu0 %v754
        %756 = vmatprep.subr.mxu0 0.0
        %v757 = vand.u32 %v274, 4294901760
        %v758 = vsub.f32 %v274, %v757
        %v759 = vand.u32 %v758, 4294901760
        %760 = vmatpush1.msra.mxu0 %v759
        %761 = vmatprep.subr.mxu0 0.0
        %v762 = vand.u32 %v275, 4294901760
        %v763 = vsub.f32 %v275, %v762
        %v764 = vand.u32 %v763, 4294901760
        %765 = vmatpush1.msra.mxu0 %v764
        %766 = vmatprep.subr.mxu0 0.0
        %v767 = vand.u32 %v276, 4294901760
        %v768 = vsub.f32 %v276, %v767
        %v769 = vand.u32 %v768, 4294901760
        %770 = vmatpush1.msra.mxu0 %v769
        %771 = vmatprep.subr.mxu0 0.0
        %v772 = vand.u32 %v277, 4294901760
        %v773 = vsub.f32 %v277, %v772
        %v774 = vand.u32 %v773, 4294901760
        %775 = vmatpush1.msra.mxu0 %v774
        %776 = vmatprep.subr.mxu0 0.0
        %v777 = vand.u32 %v278, 4294901760
        %v778 = vsub.f32 %v278, %v777
        %v779 = vand.u32 %v778, 4294901760
        %780 = vmatpush1.msra.mxu0 %v779
        %781 = vmatprep.subr.mxu0 0.0
        %v782 = vand.u32 %v279, 4294901760
        %v783 = vsub.f32 %v279, %v782
        %v784 = vand.u32 %v783, 4294901760
        %785 = vmatpush1.msra.mxu0 %v784
        %786 = vmatprep.subr.mxu0 0.0
        %787 = vmatpush1.msra.mxu0 0.0
        %788 = vmatprep.subr.mxu0 0.0
        %789 = vmatpush1.msra.mxu0 0.0
        %790 = vmatprep.subr.mxu0 0.0
        %791 = vmatpush1.msra.mxu0 0.0
        %792 = vmatprep.subr.mxu0 0.0
        %793 = vmatpush1.msra.mxu0 0.0
        %794 = vmatprep.subr.mxu0 0.0
        %795 = vmatpush1.msra.mxu0 0.0
        %796 = vmatprep.subr.mxu0 0.0
        %797 = vmatpush1.msra.mxu0 0.0
        %798 = vmatprep.subr.mxu0 0.0
        %799 = vmatpush1.msra.mxu0 0.0
        %800 = vmatprep.subr.mxu0 0.0
        %801 = vmatpush1.msra.mxu0 0.0
        %802 = vmatprep.subr.mxu0 0.0
        %803 = vmatpush1.msra.mxu0 0.0
        %804 = vmatprep.subr.mxu0 0.0
        %805 = vmatpush1.msra.mxu0 0.0
        %806 = vmatprep.subr.mxu0 0.0
        %807 = vmatpush1.msra.mxu0 0.0
        %808 = vmatprep.subr.mxu0 0.0
        %809 = vmatpush1.msra.mxu0 0.0
        %810 = vmatprep.subr.mxu0 0.0
        %811 = vmatpush1.msra.mxu0 0.0
        %812 = vmatprep.subr.mxu0 0.0
        %813 = vmatpush1.msra.mxu0 0.0
        %814 = vmatprep.subr.mxu0 0.0
        %815 = vmatpush1.msra.mxu0 0.0
        %816 = vmatprep.subr.mxu0 0.0
        %817 = vmatpush1.msra.mxu0 0.0
        %818 = vmatprep.subr.mxu0 0.0
        %819 = vmatpush1.msra.mxu0 0.0
        %820 = vmatprep.subr.mxu0 0.0
        %821 = vmatpush1.msra.mxu0 0.0
        %822 = vmatprep.subr.mxu0 0.0
        %823 = vmatpush1.msra.mxu0 0.0
        %824 = vmatprep.subr.mxu0 0.0
        %825 = vmatpush1.msra.mxu0 0.0
        %826 = vmatprep.subr.mxu0 0.0
        %827 = vmatpush1.msra.mxu0 0.0
        %828 = vmatprep.subr.mxu0 0.0
        %829 = vmatpush1.msra.mxu0 0.0
        %830 = vmatprep.mubr.f32.mxu0 0.0
        %v831 = vand.u32 %v285, 4294901760
        %832 = vmatmul.mubr.f32.gmra.mrb[0].mxu0 %v831
        %v833 = vpop.f32.mrb[0].mxu0
        %v834 = vadd.f32 %v717, %v833
        %v835 = vpop.f32.mrb[0].mxu0
        %836 = vmatprep.mubr.f32.mxu0 0.0
        %v837 = vand.u32 %v288, 4294901760
        %838 = vmatmul.mubr.f32.gmra.mrb[0].mxu0 %v837
        %v839 = vpop.f32.mrb[0].mxu0
        %v840 = vadd.f32 %v725, %v839
        %v841 = vpop.f32.mrb[0].mxu0
        %842 = vmatprep.mubr.f32.mxu0 0.0
        %v843 = vand.u32 %v291, 4294901760
        %844 = vmatmul.mubr.f32.gmra.mrb[0].mxu0 %v843
        %v845 = vpop.f32.mrb[0].mxu0
        %v846 = vadd.f32 %v733, %v845
        %v847 = vpop.f32.mrb[0].mxu0
        %848 = vdwg.mxu0
        %849 = vmatprep.subr.mxu0 0.0
        %v850 = vand.u32 %v270, 4294901760
        %851 = vmatpush1.msra.mxu0 %v850
        %852 = vmatprep.subr.mxu0 0.0
        %v853 = vand.u32 %v271, 4294901760
        %854 = vmatpush1.msra.mxu0 %v853
        %855 = vmatprep.subr.mxu0 0.0
        %v856 = vand.u32 %v272, 4294901760
        %857 = vmatpush1.msra.mxu0 %v856
        %858 = vmatprep.subr.mxu0 0.0
        %v859 = vand.u32 %v273, 4294901760
        %860 = vmatpush1.msra.mxu0 %v859
        %861 = vmatprep.subr.mxu0 0.0
        %v862 = vand.u32 %v274, 4294901760
        %863 = vmatpush1.msra.mxu0 %v862
        %864 = vmatprep.subr.mxu0 0.0
        %v865 = vand.u32 %v275, 4294901760
        %866 = vmatpush1.msra.mxu0 %v865
        %867 = vmatprep.subr.mxu0 0.0
        %v868 = vand.u32 %v276, 4294901760
        %869 = vmatpush1.msra.mxu0 %v868
        %870 = vmatprep.subr.mxu0 0.0
        %v871 = vand.u32 %v277, 4294901760
        %872 = vmatpush1.msra.mxu0 %v871
        %873 = vmatprep.subr.mxu0 0.0
        %v874 = vand.u32 %v278, 4294901760
        %875 = vmatpush1.msra.mxu0 %v874
        %876 = vmatprep.subr.mxu0 0.0
        %v877 = vand.u32 %v279, 4294901760
        %878 = vmatpush1.msra.mxu0 %v877
        %879 = vmatprep.subr.mxu0 0.0
        %880 = vmatpush1.msra.mxu0 0.0
        %881 = vmatprep.subr.mxu0 0.0
        %882 = vmatpush1.msra.mxu0 0.0
        %883 = vmatprep.subr.mxu0 0.0
        %884 = vmatpush1.msra.mxu0 0.0
        %885 = vmatprep.subr.mxu0 0.0
        %886 = vmatpush1.msra.mxu0 0.0
        %887 = vmatprep.subr.mxu0 0.0
        %888 = vmatpush1.msra.mxu0 0.0
        %889 = vmatprep.subr.mxu0 0.0
        %890 = vmatpush1.msra.mxu0 0.0
        %891 = vmatprep.subr.mxu0 0.0
        %892 = vmatpush1.msra.mxu0 0.0
        %893 = vmatprep.subr.mxu0 0.0
        %894 = vmatpush1.msra.mxu0 0.0
        %895 = vmatprep.subr.mxu0 0.0
        %896 = vmatpush1.msra.mxu0 0.0
        %897 = vmatprep.subr.mxu0 0.0
        %898 = vmatpush1.msra.mxu0 0.0
        %899 = vmatprep.subr.mxu0 0.0
        %900 = vmatpush1.msra.mxu0 0.0
        %901 = vmatprep.subr.mxu0 0.0
        %902 = vmatpush1.msra.mxu0 0.0
        %903 = vmatprep.subr.mxu0 0.0
        %904 = vmatpush1.msra.mxu0 0.0
        %905 = vmatprep.subr.mxu0 0.0
        %906 = vmatpush1.msra.mxu0 0.0
        %907 = vmatprep.subr.mxu0 0.0
        %908 = vmatpush1.msra.mxu0 0.0
        %909 = vmatprep.subr.mxu0 0.0
        %910 = vmatpush1.msra.mxu0 0.0
        %911 = vmatprep.subr.mxu0 0.0
        %912 = vmatpush1.msra.mxu0 0.0
        %913 = vmatprep.subr.mxu0 0.0
        %914 = vmatpush1.msra.mxu0 0.0
        %915 = vmatprep.subr.mxu0 0.0
        %916 = vmatpush1.msra.mxu0 0.0
        %917 = vmatprep.subr.mxu0 0.0
        %918 = vmatpush1.msra.mxu0 0.0
        %919 = vmatprep.subr.mxu0 0.0
        %920 = vmatpush1.msra.mxu0 0.0
        %921 = vmatprep.subr.mxu0 0.0
        %922 = vmatpush1.msra.mxu0 0.0
        %923 = vmatprep.mubr.f32.mxu0 0.0
        %v924 = vand.u32 %v285, 4294901760
        %925 = vmatmul.mubr.f32.gmra.mrb[0].mxu0 %v924
        %v926 = vpop.f32.mrb[0].mxu0
        %v927 = vadd.f32 %v834, %v926
        %v928 = vpop.f32.mrb[0].mxu0
        %929 = vmatprep.mubr.f32.mxu0 0.0
        %v930 = vand.u32 %v288, 4294901760
        %931 = vmatmul.mubr.f32.gmra.mrb[0].mxu0 %v930
        %v932 = vpop.f32.mrb[0].mxu0
        %v933 = vadd.f32 %v840, %v932
        %v934 = vpop.f32.mrb[0].mxu0
        %935 = vmatprep.mubr.f32.mxu0 0.0
        %v936 = vand.u32 %v291, 4294901760
        %937 = vmatmul.mubr.f32.gmra.mrb[0].mxu0 %v936
        %v938 = vpop.f32.mrb[0].mxu0
        %v939 = vadd.f32 %v846, %v938
        %v940 = vpop.f32.mrb[0].mxu0
        %941 = vdwg.mxu0
        %v942 = vmul.f32 %v927, %v278
        %v943 = vmul.f32 %v933, %v279
        %v944 = vadd.f32 %v942, %v943
        %v945 = vrot.slane %v944, 4
        %v946 = vadd.f32 %v944, %v945
        %v947 = vrot.slane %v946, 2
        %v948 = vadd.f32 %v946, %v947
        %v949 = vrot.slane %v948, 1
        %v950 = vadd.f32 %v948, %v949
        %v952 = vrot.slane %v939, 1
        %v954 = vmul.f32 %v939, %v952
        %v955 = vmax.f32 %v954, 1e-16
        %v956 = vrsqrt.pop %v955
        %v957 = vmul.f32 %v950, %v956
        %s958 = sld [smem:[#allocation2]]
        %v959 = vstv %s958
        %v960 = vmul.f32 %v957, %v959
        %s961 = sld [smem:[#allocation3]]
        %v962 = vstv %s961
        %v963 = vadd.f32 %v960, %v962
        %v964 = vxor.u32 %v963, 2147483648
        %v965 = vmul.f32 %v964, 1.442695
        %v966 = vpow.pop %v965
        %v967 = vadd.f32 %v966, 1.0
        %v968 = vrcp.pop %v967
        %v969 = vmul.f32 1.0, %v968
        %970 = vst [vmem:[%s204] sm:$0x1] %v969
        %s971 = sand.u32 %s118, 1
        %s972 = scalar_lea.sflag [#allocation6], %s971
        %s973 = sand.u32 %s118, 1
        %s974 = scalar_lea.vmem [#allocation7], %s973
        // Predicated region
        $region41: #{tpu_custom_call.1} parent=35 // pred_check
          %p975 = pneg %p128
        $region42: #{tpu_custom_call.1} parent=35 // pred_check_branch
          %977 = sbr.rel (%p975) target = $region44
        $region43: #{tpu_custom_call.1} parent=35 // pred_region
          %s979 = ssub.s32 16, 16
          %980 = vsyncadd %s972, %s979
          %s981 = smul.addr %s21, 16
          %s982 = scalar_lea.hbm %s4, %s981
          %s984 = sshll.u32 %s974, 4
          %s985 = int_to_ptr.vmem [resolvable:$true] %s984
          %987 = dma.vmem_to_hbm [thread:$0]  %s985, 16, %s982, %s972
        $region44: #{tpu_custom_call.1} parent=35 // pred_fallthru
          _
      $region36: #{tpu_custom_call.1} parent=5 // pred_fallthru
        _
      %p988 = scmp.le.s32.totalorder 2, %s16
      // Predicated region
      $region45: #{tpu_custom_call.1} parent=5 // pred_check
        %p989 = pneg %p988
      $region46: #{tpu_custom_call.1} parent=5 // pred_check_branch
        %991 = sbr.rel (%p989) target = $region48
      $region47: #{tpu_custom_call.1} parent=5 // pred_region
        %s992 = ssub.s32 %s16, 2
        // Predicated region
        $region49: #{tpu_custom_call.1} parent=47 // pred_check
          %p993 = pneg %p134
        $region50: #{tpu_custom_call.1} parent=47 // pred_check_branch
          %995 = sbr.rel (%p993) target = $region52
        $region51: #{tpu_custom_call.1} parent=47 // pred_region
          %s996 = sand.u32 %s119, 1
          %s997 = scalar_lea.sflag [#allocation6], %s996
          %s998 = sand.u32 %s119, 1
          %s999 = scalar_lea.vmem [#allocation7], %s998
          %1000 = dma.done %s997, 16
        $region52: #{tpu_custom_call.1} parent=47 // pred_fallthru
          _
      $region48: #{tpu_custom_call.1} parent=5 // pred_fallthru
        _
    $region6: #{tpu_custom_call.1} parent=1 // loop_footer
      %s20 = sadd.s32 1, %s16
    $region7: #{tpu_custom_call.1} parent=1 // loop_footer_branch
      %15 = sbr.rel target = $region3
    $region8: #{tpu_custom_call.1} parent=1 // loop_exit
      _
    %1001 = vsyncpa [#allocation5], 1
    %s1002 = scalar_lea.sflag [#allocation5], 1
    %1003 = vsyncpa %s1002, 1
    %1004 = vsyncpa [#allocation6], 1
    %s1005 = scalar_lea.sflag [#allocation6], 1
    %1006 = vsyncpa %s1005, 1

</llo_original>
